<compile_context>
chip_gen: v6e
topology: v6e:2x2x1
jax: 0.10.0
libtpu: 0.0.40
codegen_flags: <defaults>
</compile_context>

<pallas_src>
import functools

import jax
import jax.numpy as jnp
from jax.experimental import pallas as pl
from jax.experimental.pallas import tpu as pltpu


def _round_up(x, m):
    return ((x + m - 1) // m) * m


def _shift_kernel(x_ref, o_ref, carry_ref, *, th):
    # x_ref / o_ref: (b, th, W) block of the (N*C, H, W) view.
    # carry_ref:     (b, 1, W) VMEM scratch = last input row of the previous
    #                H-block for the same planes (valid when j > 0).
    j = pl.program_id(1)

    @pl.when(j == 0)
    def _():
        # First H-block of each plane group: the shifted-in row is all zeros.
        carry_ref[...] = jnp.zeros_like(carry_ref)

    # Output row 0 of this block = input row (j*th - 1)  (zeros when j == 0).
    o_ref[:, 0:1, :] = carry_ref[...]
    if th > 1:
        # Output rows 1..th-1 = input rows 0..th-2 of the same block.
        o_ref[:, 1:, :] = x_ref[:, : th - 1, :]
    # Save the last input row for the next H-block of the same planes.
    # (For the last / padded H-block this is unspecified data, but it is never
    #  read: j resets to 0 on the next plane group.)
    carry_ref[...] = x_ref[:, th - 1 : th, :]


def shift(x, *, target_block_bytes=6 << 20, vmem_limit_bytes=48 << 20,
          min_grid_steps=8):
    """Pallas equivalent of the PyTorch `shift` module forward.

    Args:
      x: jnp array of shape (N, C, H, W).
    Returns:
      jnp array of shape (N, C, H, W): x shifted down by one row, top row zero.
    """
    N, C, H, W = x.shape
    nc = N * C
    dtype = x.dtype
    itemsize = jnp.dtype(dtype).itemsize

    # VMEM footprint of one (H, W) plane after (sublane, lane) tiling/padding:
    # sublane tile is 8 for f32, 16 for bf16, 32 for int8/fp8; lanes pad to 128.
    sub = max(8, 32 // itemsize)
    padded_plane_bytes = _round_up(H, sub) * _round_up(W, 128) * itemsize

    # --- block size along the (N*C) plane axis --------------------------------
    b = max(1, target_block_bytes // padded_plane_bytes)
    # Keep >= min_grid_steps grid steps so the pipeline double-buffers and the
    # "parallel" axis has work for both v7x TensorCores.
    b = min(b, max(1, -(-nc // min_grid_steps)))
    b = min(b, nc)

    # --- block size along H (only when a single plane exceeds the budget) -----
    if padded_plane_bytes > target_block_bytes and H > sub:
        row_bytes = _round_up(W, 128) * itemsize
        th = max(sub, (target_block_bytes // max(1, row_bytes)) // sub * sub)
        th = min(th, H)
        # TODO(synk): if W alone is so large that even `sub` rows exceed the
        # budget, additionally block along W (the shift is W-independent).
    else:
        th = H

    grid = (pl.cdiv(nc, b), pl.cdiv(H, th))

    # Merging only the leading (N, C) dims keeps the minor (H, W) tiled layout
    # unchanged -> no relayout copy on either side of the pallas_call.
    x_view = x.reshape(nc, H, W)

    kernel = functools.partial(_shift_kernel, th=th)
    out = pl.pallas_call(
        kernel,
        out_shape=jax.ShapeDtypeStruct((nc, H, W), dtype),
        grid_spec=pltpu.PrefetchScalarGridSpec(
            num_scalar_prefetch=0,
            grid=grid,
            in_specs=[pl.BlockSpec((b, th, W), lambda i, j: (i, j, 0))],
            out_specs=pl.BlockSpec((b, th, W), lambda i, j: (i, j, 0)),
            scratch_shapes=[pltpu.VMEM((b, 1, W), dtype)],
        ),
        compiler_params=pltpu.CompilerParams(
            # N*C axis is independent (megacore / v7x 2-TC split); the H axis
            # carries the previous block's last row, so it must stay in order.
            dimension_semantics=("parallel", "arbitrary"),
            vmem_limit_bytes=vmem_limit_bytes,
        ),
        cost_estimate=pl.CostEstimate(
            flops=0,
            transcendentals=0,
            bytes_accessed=2 * nc * H * W * itemsize,
        ),
    )(x_view)
    return out.reshape(N, C, H, W)


def shift_ref(x):
    """Pure-JAX reference: ZeroPad2d((0,0,1,0)) then drop last row."""
    N, C, H, W = x.shape
    padded = jnp.pad(x, ((0, 0), (0, 0), (1, 0), (0, 0)))
    return padded[:, :, :H, :]


if __name__ == "__main__":
    key = jax.random.PRNGKey(0)
    x = jax.random.normal(key, (2, 4, 16, 16), dtype=jnp.float32)

    out = jax.block_until_ready(shift(x))
    ref = shift_ref(x)
    assert out.shape == ref.shape, (out.shape, ref.shape)
    assert jnp.allclose(out, ref), "mismatch vs reference (fp32)"

    # bf16 + non-(8,128)-friendly spatial shape (full-dim blocks along H, W).
    xb = jax.random.normal(jax.random.PRNGKey(1), (2, 3, 12, 20)).astype(jnp.bfloat16)
    outb = jax.block_until_ready(shift(xb))
    assert jnp.array_equal(outb, shift_ref(xb)), "mismatch vs reference (bf16)"

    # Force the H-blocked (large-plane) path with a tiny per-block budget to
    # exercise the carried-row logic across H blocks.
    xl = jax.random.normal(jax.random.PRNGKey(2), (2, 2, 64, 128), dtype=jnp.float32)
    outl = jax.block_until_ready(shift(xl, target_block_bytes=16 * 1024))
    assert jnp.allclose(outl, shift_ref(xl)), "mismatch vs reference (H-blocked)"

    print("KERNEL_OK")
</pallas_src>

<mosaic_0001>
module attributes {stable_mosaic.version = 11 : i64} {
  func.func @_shift_kernel(%arg0: i32, %arg1: i32, %arg2: memref<1x16x16xf32, #tpu.memory_space<vmem>>, %arg3: memref<1x16x16xf32, #tpu.memory_space<vmem>>, %arg4: memref<1x1x16xf32, #tpu.memory_space<vmem>>) attributes {dimension_semantics = [#tpu.dimension_semantics<parallel>, #tpu.dimension_semantics<arbitrary>], iteration_bounds = array<i64: 8, 1>, scalar_prefetch = 0 : i64, scratch_operands = 1 : i64, tpu.core_type = #tpu.core_type<tc>, window_params = [{transform_indices = @transform_0, window_bounds = array<i64: 1, 16, 16>}, {transform_indices = @transform_1, window_bounds = array<i64: 1, 16, 16>}]} {
    %c0_i32 = arith.constant 0 : i32
    %0 = arith.cmpi eq, %arg1, %c0_i32 : i32
    %1 = arith.extui %0 : i1 to i32
    %c0_i32_0 = arith.constant 0 : i32
    %2 = arith.cmpi ne, %1, %c0_i32_0 : i32
    scf.if %2 {
      %cst = arith.constant 0.000000e+00 : f32
      %9 = vector.broadcast %cst : f32 to vector<1x1x16xf32>
      %c0_16 = arith.constant 0 : index
      %c0_17 = arith.constant 0 : index
      %c0_18 = arith.constant 0 : index
      %10 = vector.load %arg4[%c0_16, %c0_17, %c0_18] : memref<1x1x16xf32, #tpu.memory_space<vmem>>, vector<1x1x16xf32>
      tpu.vector_store %arg4[%c0_16, %c0_17, %c0_18], %9 {strides = array<i32>} : memref<1x1x16xf32, #tpu.memory_space<vmem>>, vector<1x1x16xf32>,
    } else {
    }
    %c0 = arith.constant 0 : index
    %c0_1 = arith.constant 0 : index
    %c0_2 = arith.constant 0 : index
    %3 = vector.load %arg4[%c0, %c0_1, %c0_2] : memref<1x1x16xf32, #tpu.memory_space<vmem>>, vector<1x1x16xf32>
    %c0_3 = arith.constant 0 : index
    %c0_4 = arith.constant 0 : index
    %c0_5 = arith.constant 0 : index
    %4 = vector.load %arg3[%c0_3, %c0_4, %c0_5] : memref<1x16x16xf32, #tpu.memory_space<vmem>>, vector<1x1x16xf32>
    tpu.vector_store %arg3[%c0_3, %c0_4, %c0_5], %3 {strides = array<i32>} : memref<1x16x16xf32, #tpu.memory_space<vmem>>, vector<1x1x16xf32>,
    %c0_6 = arith.constant 0 : index
    %c0_7 = arith.constant 0 : index
    %c0_8 = arith.constant 0 : index
    %5 = vector.load %arg2[%c0_6, %c0_7, %c0_8] : memref<1x16x16xf32, #tpu.memory_space<vmem>>, vector<1x15x16xf32>
    %c0_9 = arith.constant 0 : index
    %c1 = arith.constant 1 : index
    %c0_10 = arith.constant 0 : index
    %6 = vector.load %arg3[%c0_9, %c1, %c0_10] : memref<1x16x16xf32, #tpu.memory_space<vmem>>, vector<1x15x16xf32>
    tpu.vector_store %arg3[%c0_9, %c1, %c0_10], %5 {strides = array<i32>} : memref<1x16x16xf32, #tpu.memory_space<vmem>>, vector<1x15x16xf32>,
    %c0_11 = arith.constant 0 : index
    %c15 = arith.constant 15 : index
    %c0_12 = arith.constant 0 : index
    %7 = vector.load %arg2[%c0_11, %c15, %c0_12] : memref<1x16x16xf32, #tpu.memory_space<vmem>>, vector<1x1x16xf32>
    %c0_13 = arith.constant 0 : index
    %c0_14 = arith.constant 0 : index
    %c0_15 = arith.constant 0 : index
    %8 = vector.load %arg4[%c0_13, %c0_14, %c0_15] : memref<1x1x16xf32, #tpu.memory_space<vmem>>, vector<1x1x16xf32>
    tpu.vector_store %arg4[%c0_13, %c0_14, %c0_15], %7 {strides = array<i32>} : memref<1x1x16xf32, #tpu.memory_space<vmem>>, vector<1x1x16xf32>,
    return
  }
  func.func @transform_0(%arg0: i32, %arg1: i32) -> (i32, i32, i32) {
    %c0_i32 = arith.constant 0 : i32
    %c0_i32_0 = arith.constant 0 : i32
    return %arg0, %arg1, %c0_i32 : i32, i32, i32
  }
  func.func @transform_1(%arg0: i32, %arg1: i32) -> (i32, i32, i32) {
    %c0_i32 = arith.constant 0 : i32
    %c0_i32_0 = arith.constant 0 : i32
    return %arg0, %arg1, %c0_i32 : i32, i32, i32
  }
}

</mosaic_0001>

<llo_original>
// kernel: tpu_custom_call.1
$region0: #{tpu_custom_call.1}
  #allocation0 [shape = 'u32[]', space=smem, size = 0x4, offset = 0x4, fixed_abs, tag = 'smem constant byte address 0x4 - core index']
  #allocation1 [shape = 'u32[144,128]{1,0:T(1,128)}', space=vmem, size = 0x12000, scoped, tag = 'internal scratch']
  #allocation2 [shape = 'f32[1,1,16]{2,1,0:T(1,128)}', space=vmem, size = 0x200, scoped, tag = 'scratch operand']
  %s0 = inlined_call_operand.hbm [shape: f32[8,16,16], index: 0, kind: input, shape index: {}]
  %s1 = inlined_call_operand.hbm [shape: f32[8,16,16], index: 1, kind: output, shape index: {}]
  %s2 = sld [smem:[#allocation0]]
  $region45: #{tpu_custom_call.1} parent=0
    _
  %s4 = ssub.s32 1, %s2
  %s5 = scalar_select 0, %s4, %s2
  $region1: #{tpu_custom_call.1} parent=0
    #allocation3 [shape = 'u8[16384]{0}', space=vmem, size = 0x4000, scoped, tag = 'input window, operand 0']
    #allocation4 [shape = 's32[2]{0}', space=sflag, size = 0x8, scoped, tag = 'scoped memory for tpu_custom_call.1']
    #allocation5 [shape = 's32[2]{0}', space=sflag, size = 0x8, scoped, tag = 'scoped memory for tpu_custom_call.1']
    #allocation6 [shape = 'u8[16384]{0}', space=vmem, size = 0x4000, scoped, tag = 'output window, operand 0']
    %6 = vsyncpa [#allocation4], 0
    %s7 = scalar_lea.sflag [#allocation4], 1
    %8 = vsyncpa %s7, 0
    %9 = vsyncpa [#allocation5], 0
    %s10 = scalar_lea.sflag [#allocation5], 1
    %11 = vsyncpa %s10, 0
    loop: start=0, step=1, limit=10
    $region2: #{tpu_custom_call.1} parent=1 // loop_pre_header
      _
    $region3: #{tpu_custom_call.1} parent=1 // loop_header
      %s13 = sphi 0, %s17
      %p14 = scmp.ge.s32.totalorder %s13, 10
      %s20 = sphi 0, %s32
      %s21 = sphi 0, %s28
      %s22 = sphi 0, %s20
      %s23 = sphi 0, %s21
      %s24 = sphi 0, %s22
      %s25 = sphi 0, %s23
      %s37 = sphi 0, %s39
      %s40 = sphi 0, %s37
      %s41 = sphi 0, %s40
      %s57 = sphi 0, %s41
      %s65 = sphi 0, %s67
      %s68 = sphi 0, %s65
      %s69 = sphi 0, %s68
      %s85 = sphi 0, %s69
    $region4: #{tpu_custom_call.1} parent=1 // loop_header_branch
      %16 = sbr.rel (%p14) target = $region8
    $region5: #{tpu_custom_call.1} parent=1 // loop_body
      %s18 = ssub.s32 %s13, 1
      %s19 = ssub.s32 %s13, 2
      %s26 = sadd.s32 1, %s21
      %p27 = scmp.ge.s32.totalorder %s26, 1
      %s28 = scalar_select %p27, 0, %s26
      %s29 = sadd.s32 1, %s20
      %s30 = scalar_select %p27, %s29, %s20
      %p31 = scmp.ge.s32.totalorder %s30, 8
      %s32 = scalar_select %p31, 0, %s30
      %s33 = ssub.s32 %s20, %s32
      %s34 = ssub.s32 %s21, %s28
      %s35 = sor.u32 %s33, %s34
      %p36 = scmp.eq.s32.totalorder %s35, 0
      %s38 = sadd.s32 %s37, 1
      %s39 = scalar_select %p36, %s37, %s38
      %p42 = pneg %p36
      %p43 = scmp.eq.s32.totalorder %s13, 7
      %p44 = por %p42, %p43
      %p45 = scmp.ne.s32.totalorder %s37, %s40
      %p46 = scmp.eq.s32.totalorder %s13, 0
      %p47 = por %p45, %p46
      %p48 = scmp.ne.s32.totalorder %s37, %s40
      %p49 = scmp.eq.s32.totalorder %s18, 7
      %p50 = por %p48, %p49
      %p51 = scmp.ne.s32.totalorder %s40, %s41
      %p52 = scmp.eq.s32.totalorder %s18, 0
      %p53 = por %p51, %p52
      %p54 = scmp.ne.s32.totalorder %s40, %s41
      %p55 = scmp.eq.s32.totalorder %s19, 7
      %p56 = por %p54, %p55
      %p58 = scmp.ne.s32.totalorder %s41, %s57
      %p59 = scmp.eq.s32.totalorder %s19, 0
      %p60 = por %p58, %p59
      %s61 = ssub.s32 %s20, %s32
      %s62 = ssub.s32 %s21, %s28
      %s63 = sor.u32 %s61, %s62
      %p64 = scmp.eq.s32.totalorder %s63, 0
      %s66 = sadd.s32 %s65, 1
      %s67 = scalar_select %p64, %s65, %s66
      %p70 = pneg %p64
      %p71 = scmp.eq.s32.totalorder %s13, 7
      %p72 = por %p70, %p71
      %p73 = scmp.ne.s32.totalorder %s65, %s68
      %p74 = scmp.eq.s32.totalorder %s13, 0
      %p75 = por %p73, %p74
      %p76 = scmp.ne.s32.totalorder %s65, %s68
      %p77 = scmp.eq.s32.totalorder %s18, 7
      %p78 = por %p76, %p77
      %p79 = scmp.ne.s32.totalorder %s68, %s69
      %p80 = scmp.eq.s32.totalorder %s18, 0
      %p81 = por %p79, %p80
      %p82 = scmp.ne.s32.totalorder %s68, %s69
      %p83 = scmp.eq.s32.totalorder %s19, 7
      %p84 = por %p82, %p83
      %p86 = scmp.ne.s32.totalorder %s69, %s85
      %p87 = scmp.eq.s32.totalorder %s19, 0
      %p88 = por %p86, %p87
      %p89 = scmp.le.s32.totalorder 1, %s13
      %p90 = scmp.lt.s32.totalorder %s13, 9
      %p91 = pnand %p89, %p90
      %p92 = pneg %p91
      // Predicated region
      $region9: #{tpu_custom_call.1} parent=5 // pred_check
        _
      $region10: #{tpu_custom_call.1} parent=5 // pred_check_branch
        %94 = sbr.rel (%p91) target = $region12
      $region11: #{tpu_custom_call.1} parent=5 // pred_region
        %s95 = ssub.s32 %s13, 1
      $region12: #{tpu_custom_call.1} parent=5 // pred_fallthru
        _
      %p96 = scmp.lt.s32.totalorder %s13, 8
      // Predicated region
      $region13: #{tpu_custom_call.1} parent=5 // pred_check
        %p97 = pneg %p96
      $region14: #{tpu_custom_call.1} parent=5 // pred_check_branch
        %99 = sbr.rel (%p97) target = $region16
      $region15: #{tpu_custom_call.1} parent=5 // pred_region
        // Predicated region
        $region17: #{tpu_custom_call.1} parent=15 // pred_check
          %p100 = pneg %p47
        $region18: #{tpu_custom_call.1} parent=15 // pred_check_branch
          %102 = sbr.rel (%p100) target = $region20
        $region19: #{tpu_custom_call.1} parent=15 // pred_region
          %s103 = sand.u32 %s37, 1
          %s104 = scalar_lea.sflag [#allocation4], %s103
          %s105 = sand.u32 %s37, 1
          %s106 = smul.addr %s105, 16
          %s107 = scalar_lea.vmem [#allocation3], %s106
          %s108 = smul.u32 2, %s21
          %s110 = ssub.s32 256, 256
          %111 = vsyncadd %s104, %s110
          %s112 = smul.addr %s20, 2
          %s113 = sadd.s32 %s108, %s112
          %s114 = smul.addr %s113, 128
          %s115 = scalar_lea.hbm %s0, %s114
          %s116 = sshll.u32 %s107, 4
          %s117 = int_to_ptr.vmem [resolvable:$true] %s116
          %122 = dma.hbm_to_vmem [thread:$0]  %s115, 256, %s117, %s104, 128, 128, 8
        $region20: #{tpu_custom_call.1} parent=15 // pred_fallthru
          _
      $region16: #{tpu_custom_call.1} parent=5 // pred_fallthru
        _
      %p123 = scmp.le.s32.totalorder 1, %s13
      %p124 = scmp.lt.s32.totalorder %s13, 9
      %p125 = pnand %p123, %p124
      %p126 = pneg %p125
      // Predicated region
      $region21: #{tpu_custom_call.1} parent=5 // pred_check
        _
      $region22: #{tpu_custom_call.1} parent=5 // pred_check_branch
        %128 = sbr.rel (%p125) target = $region24
      $region23: #{tpu_custom_call.1} parent=5 // pred_region
        %s129 = ssub.s32 %s13, 1
        %s130 = sand.u32 %s40, 1
        %s131 = scalar_lea.sflag [#allocation4], %s130
        %s132 = sand.u32 %s40, 1
        %s133 = smul.addr %s132, 16
        %s134 = scalar_lea.vmem [#allocation3], %s133
        // Predicated region
        $region25: #{tpu_custom_call.1} parent=23 // pred_check
          %p135 = pneg %p53
        $region26: #{tpu_custom_call.1} parent=23 // pred_check_branch
          %137 = sbr.rel (%p135) target = $region28
        $region27: #{tpu_custom_call.1} parent=23 // pred_region
          %138 = dma.done %s131, 256
        $region28: #{tpu_custom_call.1} parent=23 // pred_fallthru
          _
        %s139 = sand.u32 %s40, 1
        %s140 = scalar_lea.sflag [#allocation4], %s139
        %s141 = sand.u32 %s40, 1
        %s142 = smul.addr %s141, 16
        %s143 = scalar_lea.vmem [#allocation3], %s142
        %p144 = pneg %p53
        %p145 = pneg %p50
        %p146 = pneg %p81
        %p147 = pneg %p78
        %s148 = sand.u32 %s68, 1
        %s149 = scalar_lea.sflag [#allocation5], %s148
        %s150 = sand.u32 %s68, 1
        %s151 = smul.addr %s150, 16
        %s152 = scalar_lea.vmem [#allocation6], %s151
        %s153 = smul.u32 2, %s23
        %s154 = smul.u32 2, %s23
        %p155 = scmp.eq.s32.totalorder %s23, 0
        // Predicated region
        $region29: #{tpu_custom_call.1} parent=23 // pred_check
          %p156 = pneg %p155
        $region30: #{tpu_custom_call.1} parent=23 // pred_check_branch
          %158 = sbr.rel (%p156) target = $region32
        $region31: #{tpu_custom_call.1} parent=23 // pred_region
          %vm159 = vcmask 122880
          %160 = vst.msk [vmem:[#allocation2] sm:$0x1] %vm159, 0.0
        $region32: #{tpu_custom_call.1} parent=23 // pred_fallthru
          _
        %v161 = vld [vmem:[#allocation2] sm:$0x1]
        %vm162 = vcmask 122880
        %163 = vst.msk [vmem:[%s152] sm:$0x1] %vm162, %v161
        %v164 = vld [vmem:[%s134] sm:$0xff]
        %v165 = vld [vmem:[%s134 + $0x8] sm:$0x7f]
        %vm166 = vcmask 130048
        %167 = vst.msk [vmem:[%s152 + $0x1] sm:$0xff] %vm166, %v164
        %vm168 = vcmask 129024
        %169 = vst.msk [vmem:[%s152 + $0x9] sm:$0x7f] %vm168, %v165
        %v170 = vld [vmem:[%s134 + $0xf] sm:$0x1]
        %171 = vst.msk [vmem:[#allocation2] sm:$0x1] %vm162, %v170
        %s172 = sand.u32 %s68, 1
        %s173 = scalar_lea.sflag [#allocation5], %s172
        %s174 = sand.u32 %s68, 1
        %s175 = smul.addr %s174, 16
        %s176 = scalar_lea.vmem [#allocation6], %s175
        // Predicated region
        $region33: #{tpu_custom_call.1} parent=23 // pred_check
          %p177 = pneg %p78
        $region34: #{tpu_custom_call.1} parent=23 // pred_check_branch
          %179 = sbr.rel (%p177) target = $region36
        $region35: #{tpu_custom_call.1} parent=23 // pred_region
          %s180 = smul.u32 2, %s23
          %s182 = ssub.s32 256, 256
          %183 = vsyncadd %s173, %s182
          %s184 = smul.addr %s22, 2
          %s185 = sadd.s32 %s180, %s184
          %s186 = smul.addr %s185, 128
          %s187 = scalar_lea.hbm %s1, %s186
          %s188 = sshll.u32 %s176, 4
          %s189 = int_to_ptr.vmem [resolvable:$true] %s188
          %194 = dma.vmem_to_hbm [thread:$0]  %s189, 256, %s187, %s173, 128, 128, 8
        $region36: #{tpu_custom_call.1} parent=23 // pred_fallthru
          _
      $region24: #{tpu_custom_call.1} parent=5 // pred_fallthru
        _
      %p195 = scmp.le.s32.totalorder 2, %s13
      // Predicated region
      $region37: #{tpu_custom_call.1} parent=5 // pred_check
        %p196 = pneg %p195
      $region38: #{tpu_custom_call.1} parent=5 // pred_check_branch
        %198 = sbr.rel (%p196) target = $region40
      $region39: #{tpu_custom_call.1} parent=5 // pred_region
        %s199 = ssub.s32 %s13, 2
        // Predicated region
        $region41: #{tpu_custom_call.1} parent=39 // pred_check
          %p200 = pneg %p84
        $region42: #{tpu_custom_call.1} parent=39 // pred_check_branch
          %202 = sbr.rel (%p200) target = $region44
        $region43: #{tpu_custom_call.1} parent=39 // pred_region
          %s203 = sand.u32 %s69, 1
          %s204 = scalar_lea.sflag [#allocation5], %s203
          %s205 = sand.u32 %s69, 1
          %s206 = smul.addr %s205, 16
          %s207 = scalar_lea.vmem [#allocation6], %s206
          %208 = dma.done %s204, 256
        $region44: #{tpu_custom_call.1} parent=39 // pred_fallthru
          _
      $region40: #{tpu_custom_call.1} parent=5 // pred_fallthru
        _
    $region6: #{tpu_custom_call.1} parent=1 // loop_footer
      %s17 = sadd.s32 1, %s13
    $region7: #{tpu_custom_call.1} parent=1 // loop_footer_branch
      %12 = sbr.rel target = $region3
    $region8: #{tpu_custom_call.1} parent=1 // loop_exit
      _
    %209 = vsyncpa [#allocation4], 1
    %s210 = scalar_lea.sflag [#allocation4], 1
    %211 = vsyncpa %s210, 1
    %212 = vsyncpa [#allocation5], 1
    %s213 = scalar_lea.sflag [#allocation5], 1
    %214 = vsyncpa %s213, 1

</llo_original>
